<compile_context>
chip_gen: v7x
topology: tpu7x:2x2x1
jax: 0.10.0
libtpu: 0.0.40
codegen_flags: <defaults>
</compile_context>

<pallas_src>
from functools import partial, lru_cache

import numpy as np
import jax
import jax.numpy as jnp
from jax import lax
from jax.experimental import pallas as pl
from jax.experimental.pallas import tpu as pltpu


# bf16 MXU inputs (2-3x MXU throughput on v6e/v7x); accumulation stays f32.
_MXU_INPUT_DTYPE = jnp.bfloat16


# ----------------------------------------------------------------------------
# Per-chip tile caps / VMEM limit.
# ----------------------------------------------------------------------------
@lru_cache(maxsize=1)
def _hw_tile_caps():
    """(tn_cap, tk_cap, vmem_limit_bytes).  v5e/v6e (128 MiB VMEM): fat 1024
    tiles + explicit 64 MiB scoped limit.  v7x / unknown: conservative 512."""
    try:
        vmem = int(pltpu.get_tpu_info().vmem_capacity_bytes)
        if vmem >= 100 * 1024 * 1024:
            return 1024, 1024, 64 * 1024 * 1024
    except Exception:
        pass
    return 512, 512, None


def _round_up(x, m):
    return ((x + m - 1) // m) * m


def _pick_div(dim, prefs):
    for p in prefs:
        if dim % p == 0:
            return p
    return dim


# ----------------------------------------------------------------------------
# Augmentation kernel (factored):  per plane  out = A @ X @ Bt.
# Grid over (channel, batch); input is NCHW, output is CNHW -> the relayout is
# done by the BlockSpec DMA for free.
# ----------------------------------------------------------------------------
def _aug_kernel(a_ref, bt_ref, x_ref, o_ref):
    t = jnp.dot(a_ref[...], x_ref[...], preferred_element_type=jnp.float32)
    o_ref[...] = jnp.dot(
        t, bt_ref[...], preferred_element_type=jnp.float32).astype(o_ref.dtype)


def aug_apply(images_nchw, a_mat, bt_mat):
    N, C, H, W = images_nchw.shape
    return pl.pallas_call(
        _aug_kernel,
        out_shape=jax.ShapeDtypeStruct((C, N, H, W), jnp.float32),
        grid=(C, N),
        in_specs=[
            pl.BlockSpec((H, H), lambda c, n: (0, 0)),
            pl.BlockSpec((W, W), lambda c, n: (0, 0)),
            # NCHW input plane (n, c) ...
            pl.BlockSpec((None, None, H, W), lambda c, n: (n, c, 0, 0)),
        ],
        # ... written to CNHW output plane (c, n): transpose folded into DMA.
        out_specs=pl.BlockSpec((None, None, H, W), lambda c, n: (c, n, 0, 0)),
        compiler_params=pltpu.CompilerParams(
            dimension_semantics=("parallel", "parallel")),
    )(jnp.asarray(a_mat, jnp.float32), jnp.asarray(bt_mat, jnp.float32),
      images_nchw.astype(jnp.float32))


# ----------------------------------------------------------------------------
# Tiled GEMM + bias + activation kernel (conv hot path after im2col).
#   out (OC, M) = act(wT (OC, K) @ colsT (K, M) + b)   with M on lanes.
# ----------------------------------------------------------------------------
def _gemm_act_kernel(w_ref, x_ref, b_ref, o_ref, acc_ref, *, act):
    k = pl.program_id(2)

    @pl.when(k == 0)
    def _init():
        acc_ref[...] = jnp.zeros_like(acc_ref)

    acc_ref[...] += jnp.dot(w_ref[...], x_ref[...],
                            preferred_element_type=jnp.float32)

    @pl.when(k == pl.num_programs(2) - 1)
    def _finalize():
        acc = acc_ref[...] + b_ref[...]          # bias only on the last k step
        if act == "leaky":
            acc = jnp.where(acc >= 0, acc, 0.2 * acc)
        elif act == "sigmoid":
            acc = jax.nn.sigmoid(acc)
        o_ref[...] = acc.astype(o_ref.dtype)


def gemm_act(w2d, cols, b, act=None):
    """w2d (OC, K) @ cols (K, M) + b, activation fused.  Returns (OC, Mp) with
    M lane-padded up to a multiple of 128 (caller slices [:, :M])."""
    OC, K = w2d.shape
    K2, M = cols.shape
    assert K == K2
    tn_cap, tk_cap, vmem_limit = _hw_tile_caps()

    # Cast to bf16 ONCE outside the kernel; f32 accumulator inside.
    wT = w2d.astype(_MXU_INPUT_DTYPE)
    colsT = cols.astype(_MXU_INPUT_DTYPE)
    b2d = b.reshape(OC, 1).astype(jnp.float32)

    # Lane-dense output: pad M up to a multiple of 128 so every output tile is
    # an unmasked full-lane store.
    Mp = _round_up(M, 128)
    if Mp != M:
        colsT = jnp.pad(colsT, ((0, 0), (0, Mp - M)))

    # K tiling: full-K block when it fits the cap, otherwise zero-pad K to a
    # multiple of the cap (padded products are exactly zero).
    if K <= tk_cap:
        tk, Kp = K, K
    else:
        tk = tk_cap
        Kp = _round_up(K, tk)
        if Kp != K:
            wT = jnp.pad(wT, ((0, 0), (0, Kp - K)))
            colsT = jnp.pad(colsT, ((0, Kp - K), (0, 0)))

    tm = OC if OC <= 256 else _pick_div(OC, (256, 128, 64, 32, 16, 8))
    tn = Mp if Mp <= tn_cap else _pick_div(Mp, (tn_cap, 512, 256, 128))

    grid = (OC // tm, Mp // tn, Kp // tk)
    cost = pl.CostEstimate(
        flops=int(2 * OC * Kp * Mp),
        transcendentals=int(OC * Mp) if act == "sigmoid" else 0,
        bytes_accessed=int(wT.size * 2 + colsT.size * 2
                           + b2d.size * 4 + OC * Mp * 4),
    )
    return pl.pallas_call(
        partial(_gemm_act_kernel, act=act),
        out_shape=jax.ShapeDtypeStruct((OC, Mp), jnp.float32),
        grid=grid,
        in_specs=[
            pl.BlockSpec((tm, tk), lambda i, j, k: (i, k)),
            pl.BlockSpec((tk, tn), lambda i, j, k: (k, j)),
            pl.BlockSpec((tm, 1), lambda i, j, k: (i, 0)),
        ],
        out_specs=pl.BlockSpec((tm, tn), lambda i, j, k: (i, j)),
        scratch_shapes=[pltpu.VMEM((tm, tn), jnp.float32)],
        compiler_params=pltpu.CompilerParams(
            dimension_semantics=("parallel", "parallel", "arbitrary"),
            vmem_limit_bytes=vmem_limit),
        cost_estimate=cost,
    )(wT, colsT, b2d)


# ----------------------------------------------------------------------------
# Conv2d = CNHW im2col (XLA glue, no transposes) + Pallas GEMM.
# ----------------------------------------------------------------------------
def _im2col_cnhw(x, k, stride, pad):
    # x: (C, N, H, W) -> cols (C*k*k, N*OH*OW); K-ordering matches the
    # PyTorch weight reshape (IC, kh, kw).
    C, N, H, W = x.shape
    xp = jnp.pad(x, ((0, 0), (0, 0), (pad, pad), (pad, pad)))
    OH = (H + 2 * pad - k) // stride + 1
    OW = (W + 2 * pad - k) // stride + 1
    patches = []
    for i in range(k):
        for j in range(k):
            patches.append(xp[:, :, i:i + stride * OH:stride,
                              j:j + stride * OW:stride])       # (C, N, OH, OW)
    cols = jnp.stack(patches, axis=1)                           # (C, k*k, N, OH, OW)
    return cols.reshape(C * k * k, N * OH * OW), OH, OW


def conv2d_pallas(x_cnhw, w, b, stride, pad, act=None):
    OC, IC, k, _ = w.shape
    C, N, H, W = x_cnhw.shape
    assert C == IC
    # Cast activations to bf16 before im2col: halves the im2col HBM round trip.
    cols, OH, OW = _im2col_cnhw(x_cnhw.astype(_MXU_INPUT_DTYPE), k, stride, pad)
    out = gemm_act(w.reshape(OC, IC * k * k).astype(_MXU_INPUT_DTYPE),
                   cols, b, act=act)                            # (OC, Mp)
    M = N * OH * OW
    return out[:, :M].reshape(OC, N, OH, OW)                    # stays CNHW


def discriminator(x_cnhw, params):
    h = conv2d_pallas(x_cnhw, params["w1"], params["b1"], 2, 1, act="leaky")
    h = conv2d_pallas(h, params["w2"], params["b2"], 2, 1, act="leaky")
    # Final conv collapses the 4x4 spatial extent to 1x1: a (1, 512)@(512, N)
    # GEMM with a (1, N) result -- too small for a pallas_call (tm=1 wastes
    # the MXU, fully masked stores), so fold it into plain XLA ops.
    k3 = params["w3"].shape[2]
    cols3, OH3, OW3 = _im2col_cnhw(h, k3, 1, 0)                 # (512, N*OH3*OW3)
    logits = params["w3"].reshape(1, -1) @ cols3 + params["b3"].reshape(1, 1)
    out = jax.nn.sigmoid(logits)                                # (1, N*OH3*OW3)
    N = x_cnhw.shape[1]
    return out.reshape(1, N * OH3 * OW3).T.reshape(N, -1)       # (N, 1)


# ----------------------------------------------------------------------------
# Host-side augmentation decisions -> factored (A, Bt) interpolation matrices.
# Mirrors the PyTorch module's np.random call order/semantics exactly.
# ----------------------------------------------------------------------------
def _interp_mat(size, new_size, off):
    M = np.zeros((size, size), dtype=np.float32)
    if new_size == 1:
        M[:, off] = 1.0
        return M
    ratio = (new_size - 1) / (size - 1)                         # align_corners=True
    for i in range(size):
        src = i * ratio
        i0 = int(np.floor(src))
        i1 = min(i0 + 1, new_size - 1)
        frac = src - i0
        M[i, off + i0] += 1.0 - frac
        M[i, off + i1] += frac
    return M


def build_aug_factors(size, prob, rng):
    """Returns ((A, Bt), decisions) so that per plane  out = A @ X @ Bt  is the
    random hflip -> crop -> bilinear resize of the module, or (None, None) when
    the prob check misses (aug kernel skipped entirely)."""
    if not (rng.rand() < prob):                                 # np.random.random() < prob
        return None, None
    scale = rng.uniform(0.75, 0.95)                             # random_scale
    hflip_keep = 0.5 > rng.rand()                               # random_hflip(prob=0.5)
    new_size = int(size * scale)
    dsize = size - new_size
    h0 = int(rng.rand() * dsize)
    w0 = int(rng.rand() * dsize)
    A = _interp_mat(size, new_size, h0)                         # row (H) crop+interp
    B = _interp_mat(size, new_size, w0)                         # col (W) crop+interp
    Bt = np.ascontiguousarray(B.T)
    if not hflip_keep:
        # The reference module flips BEFORE the crop; reversing Bt's rows is
        # exactly "flip the input width axis, then crop/resize".
        Bt = np.ascontiguousarray(Bt[::-1, :])
    decisions = dict(hflip_keep=hflip_keep, new_size=new_size, h0=h0, w0=w0)
    return (A.astype(np.float32), Bt.astype(np.float32)), decisions


# ----------------------------------------------------------------------------
def aug_wrapper_forward(images, params, aug_factors):
    if aug_factors is not None:
        A, Bt = aug_factors
        x = aug_apply(images, A, Bt)                            # (C, N, H, W)
    else:
        # TODO(synk): fold this relayout into conv1's im2col BlockSpec too.
        x = images.transpose(1, 0, 2, 3)                        # CNHW
    return discriminator(x, params)


# ----------------------------------------------------------------------------
# Independent reference: flip -> crop -> bilinear(align_corners=True) done
# directly in numpy (no A/Bt, no kron), convs via lax.conv_general_dilated.
# ----------------------------------------------------------------------------
def _bilinear_resize_ac_np(x, out_size):
    h, w = x.shape[-2], x.shape[-1]

    def axis_coords(n_in):
        if out_size == 1 or n_in == 1:
            src = np.zeros((out_size,), dtype=np.float64)
        else:
            src = np.arange(out_size, dtype=np.float64) * (n_in - 1) / (out_size - 1)
        lo = np.floor(src).astype(np.int64)
        hi = np.minimum(lo + 1, n_in - 1)
        return lo, hi, src - lo

    r0, r1, rf = axis_coords(h)
    c0, c1, cf = axis_coords(w)
    rf = rf[:, None]
    cf = cf[None, :]
    x00 = x[..., r0[:, None], c0[None, :]]
    x01 = x[..., r0[:, None], c1[None, :]]
    x10 = x[..., r1[:, None], c0[None, :]]
    x11 = x[..., r1[:, None], c1[None, :]]
    top = x00 * (1.0 - cf) + x01 * cf
    bot = x10 * (1.0 - cf) + x11 * cf
    return top * (1.0 - rf) + bot * rf


def _reference_forward(images, params, decisions):
    x = np.asarray(images, dtype=np.float64)
    if decisions is not None:
        if not decisions["hflip_keep"]:
            x = x[..., ::-1]                                    # torch.flip dims=(3,)
        ns, h0, w0 = decisions["new_size"], decisions["h0"], decisions["w0"]
        cropped = x[..., h0:h0 + ns, w0:w0 + ns]
        x = _bilinear_resize_ac_np(cropped, images.shape[-1])
    x = jnp.asarray(x, jnp.float32)                             # NCHW

    def conv(x, w, b, s, p, act):
        o = lax.conv_general_dilated(
            x, w, (s, s), [(p, p), (p, p)],
            dimension_numbers=("NCHW", "OIHW", "NCHW"))
        o = o + b.reshape(1, -1, 1, 1)
        if act == "leaky":
            o = jnp.where(o >= 0, o, 0.2 * o)
        elif act == "sigmoid":
            o = jax.nn.sigmoid(o)
        return o

    h = conv(x, params["w1"], params["b1"], 2, 1, "leaky")
    h = conv(h, params["w2"], params["b2"], 2, 1, "leaky")
    h = conv(h, params["w3"], params["b3"], 1, 0, "sigmoid")
    return h.reshape(images.shape[0], -1)                       # (N, 1)


if __name__ == "__main__":
    N, C, S = 2, 3, 16
    prob = 0.9

    key = jax.random.PRNGKey(0)
    kx, k1, k2, k3 = jax.random.split(key, 4)
    images = jax.random.normal(kx, (N, C, S, S), dtype=jnp.float32)

    # Deterministic synthetic discriminator params (DCGAN-style, no BN).
    params = {
        "w1": 0.05 * jax.random.normal(k1, (16, C, 4, 4), dtype=jnp.float32),
        "b1": 0.01 * jnp.arange(16, dtype=jnp.float32),
        "w2": 0.05 * jax.random.normal(k2, (32, 16, 4, 4), dtype=jnp.float32),
        "b2": 0.01 * (jnp.arange(32, dtype=jnp.float32) - 16.0),
        "w3": 0.05 * jax.random.normal(k3, (1, 32, 4, 4), dtype=jnp.float32),
        "b3": jnp.full((1,), 0.05, jnp.float32),
    }

    # Host-side random augmentation decisions (deterministic seed); same
    # np.random call order as the PyTorch module's forward().
    host_rng = np.random.RandomState(0)
    factors, decisions = build_aug_factors(S, prob, host_rng)
    if factors is not None:
        factors = (jnp.asarray(factors[0]), jnp.asarray(factors[1]))

    fwd = jax.jit(aug_wrapper_forward)
    out = jax.block_until_ready(fwd(images, params, factors))

    assert out.shape == (N, 1), out.shape
    assert bool(jnp.all(jnp.isfinite(out)))

    ref = jax.block_until_ready(_reference_forward(images, params, decisions))
    assert bool(jnp.allclose(out, ref, rtol=2e-2, atol=2e-2)), (
        float(jnp.max(jnp.abs(out - ref))))

    print("KERNEL_OK")
</pallas_src>

<mosaic_0001>
module attributes {stable_mosaic.version = 11 : i64} {
  func.func @_aug_kernel(%arg0: i32, %arg1: i32, %arg2: memref<16x16xf32, #tpu.memory_space<vmem>>, %arg3: memref<16x16xf32, #tpu.memory_space<vmem>>, %arg4: memref<1x1x16x16xf32, #tpu.memory_space<vmem>>, %arg5: memref<1x1x16x16xf32, #tpu.memory_space<vmem>>) attributes {dimension_semantics = [#tpu.dimension_semantics<parallel>, #tpu.dimension_semantics<parallel>], iteration_bounds = array<i64: 3, 2>, scalar_prefetch = 0 : i64, scratch_operands = 0 : i64, tpu.core_type = #tpu.core_type<tc>, window_params = [{pipeline_mode = #tpu.pipeline_mode<synchronous>, transform_indices = @transform_0, window_bounds = array<i64: 16, 16>}, {pipeline_mode = #tpu.pipeline_mode<synchronous>, transform_indices = @transform_1, window_bounds = array<i64: 16, 16>}, {transform_indices = @transform_2, window_bounds = array<i64: 1, 1, 16, 16>}, {transform_indices = @transform_3, window_bounds = array<i64: 1, 1, 16, 16>}]} {
    %c0 = arith.constant 0 : index
    %c0_0 = arith.constant 0 : index
    %0 = vector.load %arg2[%c0, %c0_0] : memref<16x16xf32, #tpu.memory_space<vmem>>, vector<16x16xf32>
    %c0_1 = arith.constant 0 : index
    %c0_2 = arith.constant 0 : index
    %c0_3 = arith.constant 0 : index
    %c0_4 = arith.constant 0 : index
    %1 = vector.load %arg4[%c0_1, %c0_2, %c0_3, %c0_4] : memref<1x1x16x16xf32, #tpu.memory_space<vmem>>, vector<1x1x16x16xf32>
    %2 = vector.shape_cast %1 : vector<1x1x16x16xf32> to vector<16x16xf32>
    %cst = arith.constant dense<0.000000e+00> : vector<16x16xf32>
    %3 = tpu.matmul %0, %2, %cst {dimension_numbers = #tpu.dot_dimension_numbers<[1], [0], [0], [1], [0, 0, 1, 1], [], []>} : vector<16x16xf32>, vector<16x16xf32>, vector<16x16xf32> -> vector<16x16xf32>
    %c0_5 = arith.constant 0 : index
    %c0_6 = arith.constant 0 : index
    %4 = vector.load %arg3[%c0_5, %c0_6] : memref<16x16xf32, #tpu.memory_space<vmem>>, vector<16x16xf32>
    %cst_7 = arith.constant dense<0.000000e+00> : vector<16x16xf32>
    %5 = tpu.matmul %3, %4, %cst_7 {dimension_numbers = #tpu.dot_dimension_numbers<[1], [0], [0], [1], [0, 0, 1, 1], [], []>} : vector<16x16xf32>, vector<16x16xf32>, vector<16x16xf32> -> vector<16x16xf32>
    %c0_8 = arith.constant 0 : index
    %c0_9 = arith.constant 0 : index
    %c0_10 = arith.constant 0 : index
    %c0_11 = arith.constant 0 : index
    %6 = vector.load %arg5[%c0_8, %c0_9, %c0_10, %c0_11] : memref<1x1x16x16xf32, #tpu.memory_space<vmem>>, vector<1x1x16x16xf32>
    %7 = vector.shape_cast %6 : vector<1x1x16x16xf32> to vector<16x16xf32>
    %8 = vector.shape_cast %5 : vector<16x16xf32> to vector<1x1x16x16xf32>
    tpu.vector_store %arg5[%c0_8, %c0_9, %c0_10, %c0_11], %8 {strides = array<i32>} : memref<1x1x16x16xf32, #tpu.memory_space<vmem>>, vector<1x1x16x16xf32>,
    return
  }
  func.func @transform_0(%arg0: i32, %arg1: i32) -> (i32, i32) {
    %c0_i32 = arith.constant 0 : i32
    %c0_i32_0 = arith.constant 0 : i32
    %c0_i32_1 = arith.constant 0 : i32
    return %c0_i32, %c0_i32_0 : i32, i32
  }
  func.func @transform_1(%arg0: i32, %arg1: i32) -> (i32, i32) {
    %c0_i32 = arith.constant 0 : i32
    %c0_i32_0 = arith.constant 0 : i32
    %c0_i32_1 = arith.constant 0 : i32
    return %c0_i32, %c0_i32_0 : i32, i32
  }
  func.func @transform_2(%arg0: i32, %arg1: i32) -> (i32, i32, i32, i32) {
    %c0_i32 = arith.constant 0 : i32
    %c0_i32_0 = arith.constant 0 : i32
    %c0_i32_1 = arith.constant 0 : i32
    return %arg1, %arg0, %c0_i32, %c0_i32_0 : i32, i32, i32, i32
  }
  func.func @transform_3(%arg0: i32, %arg1: i32) -> (i32, i32, i32, i32) {
    %c0_i32 = arith.constant 0 : i32
    %c0_i32_0 = arith.constant 0 : i32
    %c0_i32_1 = arith.constant 0 : i32
    return %arg0, %arg1, %c0_i32, %c0_i32_0 : i32, i32, i32, i32
  }
}

module attributes {stable_mosaic.version = 11 : i64} {
  func.func @_gemm_act_kernel(%arg0: i32, %arg1: i32, %arg2: i32, %arg3: memref<16x48xbf16, #tpu.memory_space<vmem>>, %arg4: memref<48x128xbf16, #tpu.memory_space<vmem>>, %arg5: memref<16x1xf32, #tpu.memory_space<vmem>>, %arg6: memref<16x128xf32, #tpu.memory_space<vmem>>, %arg7: memref<16x128xf32, #tpu.memory_space<vmem>>) attributes {dimension_semantics = [#tpu.dimension_semantics<parallel>, #tpu.dimension_semantics<parallel>, #tpu.dimension_semantics<arbitrary>], iteration_bounds = array<i64: 1, 1, 1>, scalar_prefetch = 0 : i64, scratch_operands = 1 : i64, tpu.core_type = #tpu.core_type<tc>, window_params = [{transform_indices = @transform_0, window_bounds = array<i64: 16, 48>}, {transform_indices = @transform_1, window_bounds = array<i64: 48, 128>}, {transform_indices = @transform_2, window_bounds = array<i64: 16, 1>}, {transform_indices = @transform_3, window_bounds = array<i64: 16, 128>}]} {
    %c0_i32 = arith.constant 0 : i32
    %0 = arith.cmpi eq, %arg2, %c0_i32 : i32
    %1 = arith.extui %0 : i1 to i32
    %c0_i32_0 = arith.constant 0 : i32
    %2 = arith.cmpi ne, %1, %c0_i32_0 : i32
    scf.if %2 {
      %cst_10 = arith.constant 0.000000e+00 : f32
      %12 = vector.broadcast %cst_10 : f32 to vector<16x128xf32>
      %c0_11 = arith.constant 0 : index
      %c0_12 = arith.constant 0 : index
      %13 = vector.load %arg7[%c0_11, %c0_12] : memref<16x128xf32, #tpu.memory_space<vmem>>, vector<16x128xf32>
      tpu.vector_store %arg7[%c0_11, %c0_12], %12 {strides = array<i32>} : memref<16x128xf32, #tpu.memory_space<vmem>>, vector<16x128xf32>,
    } else {
    }
    %c0 = arith.constant 0 : index
    %c0_1 = arith.constant 0 : index
    %3 = vector.load %arg7[%c0, %c0_1] : memref<16x128xf32, #tpu.memory_space<vmem>>, vector<16x128xf32>
    %c0_2 = arith.constant 0 : index
    %c0_3 = arith.constant 0 : index
    %4 = vector.load %arg3[%c0_2, %c0_3] : memref<16x48xbf16, #tpu.memory_space<vmem>>, vector<16x48xbf16>
    %c0_4 = arith.constant 0 : index
    %c0_5 = arith.constant 0 : index
    %5 = vector.load %arg4[%c0_4, %c0_5] : memref<48x128xbf16, #tpu.memory_space<vmem>>, vector<48x128xbf16>
    %cst = arith.constant dense<0.000000e+00> : vector<16x128xf32>
    %6 = tpu.matmul %4, %5, %cst {dimension_numbers = #tpu.dot_dimension_numbers<[1], [0], [0], [1], [0, 0, 1, 1], [], []>} : vector<16x48xbf16>, vector<48x128xbf16>, vector<16x128xf32> -> vector<16x128xf32>
    %7 = arith.addf %3, %6 : vector<16x128xf32>
    %c0_6 = arith.constant 0 : index
    %c0_7 = arith.constant 0 : index
    %8 = vector.load %arg7[%c0_6, %c0_7] : memref<16x128xf32, #tpu.memory_space<vmem>>, vector<16x128xf32>
    tpu.vector_store %arg7[%c0_6, %c0_7], %7 {strides = array<i32>} : memref<16x128xf32, #tpu.memory_space<vmem>>, vector<16x128xf32>,
    %c0_i32_8 = arith.constant 0 : i32
    %9 = arith.cmpi eq, %arg2, %c0_i32_8 : i32
    %10 = arith.extui %9 : i1 to i32
    %c0_i32_9 = arith.constant 0 : i32
    %11 = arith.cmpi ne, %10, %c0_i32_9 : i32
    scf.if %11 {
      %c0_10 = arith.constant 0 : index
      %c0_11 = arith.constant 0 : index
      %12 = vector.load %arg7[%c0_10, %c0_11] : memref<16x128xf32, #tpu.memory_space<vmem>>, vector<16x128xf32>
      %c0_12 = arith.constant 0 : index
      %c0_13 = arith.constant 0 : index
      %13 = vector.load %arg5[%c0_12, %c0_13] : memref<16x1xf32, #tpu.memory_space<vmem>>, vector<16x1xf32>
      %14 = vector.broadcast %13 : vector<16x1xf32> to vector<16x128xf32>
      %15 = arith.addf %12, %14 : vector<16x128xf32>
      %cst_14 = arith.constant 0.000000e+00 : f32
      %16 = vector.broadcast %cst_14 : f32 to vector<16x128xf32>
      %17 = arith.cmpf oge, %15, %16 : vector<16x128xf32>
      %cst_15 = arith.constant 2.000000e-01 : f32
      %18 = vector.broadcast %cst_15 : f32 to vector<16x128xf32>
      %19 = arith.mulf %18, %15 : vector<16x128xf32>
      %20 = arith.select %17, %15, %19 : vector<16x128xi1>, vector<16x128xf32>
      %c0_16 = arith.constant 0 : index
      %c0_17 = arith.constant 0 : index
      %21 = vector.load %arg6[%c0_16, %c0_17] : memref<16x128xf32, #tpu.memory_space<vmem>>, vector<16x128xf32>
      tpu.vector_store %arg6[%c0_16, %c0_17], %20 {strides = array<i32>} : memref<16x128xf32, #tpu.memory_space<vmem>>, vector<16x128xf32>,
    } else {
    }
    return
  }
  func.func @transform_0(%arg0: i32, %arg1: i32, %arg2: i32) -> (i32, i32) {
    %c0_i32 = arith.constant 0 : i32
    return %arg0, %arg2 : i32, i32
  }
  func.func @transform_1(%arg0: i32, %arg1: i32, %arg2: i32) -> (i32, i32) {
    %c0_i32 = arith.constant 0 : i32
    return %arg2, %arg1 : i32, i32
  }
  func.func @transform_2(%arg0: i32, %arg1: i32, %arg2: i32) -> (i32, i32) {
    %c0_i32 = arith.constant 0 : i32
    %c0_i32_0 = arith.constant 0 : i32
    return %arg0, %c0_i32 : i32, i32
  }
  func.func @transform_3(%arg0: i32, %arg1: i32, %arg2: i32) -> (i32, i32) {
    %c0_i32 = arith.constant 0 : i32
    return %arg0, %arg1 : i32, i32
  }
}

module attributes {stable_mosaic.version = 11 : i64} {
  func.func @_gemm_act_kernel(%arg0: i32, %arg1: i32, %arg2: i32, %arg3: memref<32x256xbf16, #tpu.memory_space<vmem>>, %arg4: memref<256x128xbf16, #tpu.memory_space<vmem>>, %arg5: memref<32x1xf32, #tpu.memory_space<vmem>>, %arg6: memref<32x128xf32, #tpu.memory_space<vmem>>, %arg7: memref<32x128xf32, #tpu.memory_space<vmem>>) attributes {dimension_semantics = [#tpu.dimension_semantics<parallel>, #tpu.dimension_semantics<parallel>, #tpu.dimension_semantics<arbitrary>], iteration_bounds = array<i64: 1, 1, 1>, scalar_prefetch = 0 : i64, scratch_operands = 1 : i64, tpu.core_type = #tpu.core_type<tc>, window_params = [{transform_indices = @transform_0, window_bounds = array<i64: 32, 256>}, {transform_indices = @transform_1, window_bounds = array<i64: 256, 128>}, {transform_indices = @transform_2, window_bounds = array<i64: 32, 1>}, {transform_indices = @transform_3, window_bounds = array<i64: 32, 128>}]} {
    %c0_i32 = arith.constant 0 : i32
    %0 = arith.cmpi eq, %arg2, %c0_i32 : i32
    %1 = arith.extui %0 : i1 to i32
    %c0_i32_0 = arith.constant 0 : i32
    %2 = arith.cmpi ne, %1, %c0_i32_0 : i32
    scf.if %2 {
      %cst_10 = arith.constant 0.000000e+00 : f32
      %12 = vector.broadcast %cst_10 : f32 to vector<32x128xf32>
      %c0_11 = arith.constant 0 : index
      %c0_12 = arith.constant 0 : index
      %13 = vector.load %arg7[%c0_11, %c0_12] : memref<32x128xf32, #tpu.memory_space<vmem>>, vector<32x128xf32>
      tpu.vector_store %arg7[%c0_11, %c0_12], %12 {strides = array<i32>} : memref<32x128xf32, #tpu.memory_space<vmem>>, vector<32x128xf32>,
    } else {
    }
    %c0 = arith.constant 0 : index
    %c0_1 = arith.constant 0 : index
    %3 = vector.load %arg7[%c0, %c0_1] : memref<32x128xf32, #tpu.memory_space<vmem>>, vector<32x128xf32>
    %c0_2 = arith.constant 0 : index
    %c0_3 = arith.constant 0 : index
    %4 = vector.load %arg3[%c0_2, %c0_3] : memref<32x256xbf16, #tpu.memory_space<vmem>>, vector<32x256xbf16>
    %c0_4 = arith.constant 0 : index
    %c0_5 = arith.constant 0 : index
    %5 = vector.load %arg4[%c0_4, %c0_5] : memref<256x128xbf16, #tpu.memory_space<vmem>>, vector<256x128xbf16>
    %cst = arith.constant dense<0.000000e+00> : vector<32x128xf32>
    %6 = tpu.matmul %4, %5, %cst {dimension_numbers = #tpu.dot_dimension_numbers<[1], [0], [0], [1], [0, 0, 1, 1], [], []>} : vector<32x256xbf16>, vector<256x128xbf16>, vector<32x128xf32> -> vector<32x128xf32>
    %7 = arith.addf %3, %6 : vector<32x128xf32>
    %c0_6 = arith.constant 0 : index
    %c0_7 = arith.constant 0 : index
    %8 = vector.load %arg7[%c0_6, %c0_7] : memref<32x128xf32, #tpu.memory_space<vmem>>, vector<32x128xf32>
    tpu.vector_store %arg7[%c0_6, %c0_7], %7 {strides = array<i32>} : memref<32x128xf32, #tpu.memory_space<vmem>>, vector<32x128xf32>,
    %c0_i32_8 = arith.constant 0 : i32
    %9 = arith.cmpi eq, %arg2, %c0_i32_8 : i32
    %10 = arith.extui %9 : i1 to i32
    %c0_i32_9 = arith.constant 0 : i32
    %11 = arith.cmpi ne, %10, %c0_i32_9 : i32
    scf.if %11 {
      %c0_10 = arith.constant 0 : index
      %c0_11 = arith.constant 0 : index
      %12 = vector.load %arg7[%c0_10, %c0_11] : memref<32x128xf32, #tpu.memory_space<vmem>>, vector<32x128xf32>
      %c0_12 = arith.constant 0 : index
      %c0_13 = arith.constant 0 : index
      %13 = vector.load %arg5[%c0_12, %c0_13] : memref<32x1xf32, #tpu.memory_space<vmem>>, vector<32x1xf32>
      %14 = vector.broadcast %13 : vector<32x1xf32> to vector<32x128xf32>
      %15 = arith.addf %12, %14 : vector<32x128xf32>
      %cst_14 = arith.constant 0.000000e+00 : f32
      %16 = vector.broadcast %cst_14 : f32 to vector<32x128xf32>
      %17 = arith.cmpf oge, %15, %16 : vector<32x128xf32>
      %cst_15 = arith.constant 2.000000e-01 : f32
      %18 = vector.broadcast %cst_15 : f32 to vector<32x128xf32>
      %19 = arith.mulf %18, %15 : vector<32x128xf32>
      %20 = arith.select %17, %15, %19 : vector<32x128xi1>, vector<32x128xf32>
      %c0_16 = arith.constant 0 : index
      %c0_17 = arith.constant 0 : index
      %21 = vector.load %arg6[%c0_16, %c0_17] : memref<32x128xf32, #tpu.memory_space<vmem>>, vector<32x128xf32>
      tpu.vector_store %arg6[%c0_16, %c0_17], %20 {strides = array<i32>} : memref<32x128xf32, #tpu.memory_space<vmem>>, vector<32x128xf32>,
    } else {
    }
    return
  }
  func.func @transform_0(%arg0: i32, %arg1: i32, %arg2: i32) -> (i32, i32) {
    %c0_i32 = arith.constant 0 : i32
    return %arg0, %arg2 : i32, i32
  }
  func.func @transform_1(%arg0: i32, %arg1: i32, %arg2: i32) -> (i32, i32) {
    %c0_i32 = arith.constant 0 : i32
    return %arg2, %arg1 : i32, i32
  }
  func.func @transform_2(%arg0: i32, %arg1: i32, %arg2: i32) -> (i32, i32) {
    %c0_i32 = arith.constant 0 : i32
    %c0_i32_0 = arith.constant 0 : i32
    return %arg0, %c0_i32 : i32, i32
  }
  func.func @transform_3(%arg0: i32, %arg1: i32, %arg2: i32) -> (i32, i32) {
    %c0_i32 = arith.constant 0 : i32
    return %arg0, %arg1 : i32, i32
  }
}

</mosaic_0001>

<llo_original>
// kernel: aug_wrapper_forward.3
$region0: #{aug_wrapper_forward.3}
  #allocation0 [shape = 'u32[]', space=smem, size = 0x4, offset = 0x4, fixed_abs, tag = 'smem constant byte address 0x4 - core index']
  #allocation1 [shape = 'u32[144,128]{1,0:T(1,128)}', space=vmem, size = 0x12000, scoped, tag = 'internal scratch']
  %s0 = inlined_call_operand.vmem [shape: f32[16,16], index: 0, kind: input, shape index: {}]
  %s1 = inlined_call_operand.hbm [shape: f32[16,16], index: 1, kind: input, shape index: {}]
  %s2 = inlined_call_operand.hbm [shape: f32[2,3,16,16], index: 2, kind: input, shape index: {}]
  %s3 = inlined_call_operand.vmem [shape: f32[3,2,16,16], index: 3, kind: output, shape index: {}]
  %s4 = sld [smem:[#allocation0]]
  $region53: #{aug_wrapper_forward.3} parent=0
    _
  %s6 = ssub.s32 1, %s4
  %s7 = scalar_select 0, %s6, %s4
  $region1: #{aug_wrapper_forward.3} parent=0
    #allocation2 [shape = 'u8[8192]{0}', space=vmem, size = 0x2000, scoped, tag = 'input window, operand 1, single buffered']
    #allocation3 [shape = 's32[2]{0}', space=sflag, size = 0x8, scoped, tag = 'scoped memory for aug_wrapper_forward.3']
    #allocation4 [shape = 'u8[16384]{0}', space=vmem, size = 0x4000, scoped, tag = 'input window, operand 2']
    #allocation5 [shape = 's32[2]{0}', space=sflag, size = 0x8, scoped, tag = 'scoped memory for aug_wrapper_forward.3']
    %8 = vsyncpa [#allocation3], 0
    %9 = vsyncpa [#allocation5], 0
    %s10 = scalar_lea.sflag [#allocation5], 1
    %11 = vsyncpa %s10, 0
    loop: start=0, step=1, limit=8
    $region2: #{aug_wrapper_forward.3} parent=1 // loop_pre_header
      _
    $region3: #{aug_wrapper_forward.3} parent=1 // loop_header
      %s13 = sphi 0, %s17
      %p14 = scmp.ge.s32.totalorder %s13, 8
      %s20 = sphi 0, %s32
      %s21 = sphi 0, %s28
      %s22 = sphi 0, %s20
      %s23 = sphi 0, %s21
      %s24 = sphi 0, %s22
      %s25 = sphi 0, %s23
      %s33 = sphi 0, %s33
      %s35 = sphi 0, %s33
      %s36 = sphi 0, %s35
      %s50 = sphi 0, %s36
      %s54 = sphi 0, %s54
      %s56 = sphi 0, %s54
      %s57 = sphi 0, %s56
      %s71 = sphi 0, %s57
      %s79 = sphi 0, %s81
      %s82 = sphi 0, %s79
      %s83 = sphi 0, %s82
      %s99 = sphi 0, %s83
      %s107 = sphi 0, %s109
      %s110 = sphi 0, %s107
      %s111 = sphi 0, %s110
      %s127 = sphi 0, %s111
    $region4: #{aug_wrapper_forward.3} parent=1 // loop_header_branch
      %16 = sbr.rel (%p14) target = $region8
    $region5: #{aug_wrapper_forward.3} parent=1 // loop_body
      %s18 = ssub.s32 %s13, 1
      %s19 = ssub.s32 %s13, 2
      %s26 = sadd.s32 1, %s21
      %p27 = scmp.ge.s32.totalorder %s26, 2
      %s28 = scalar_select %p27, 0, %s26
      %s29 = sadd.s32 1, %s20
      %s30 = scalar_select %p27, %s29, %s20
      %p31 = scmp.ge.s32.totalorder %s30, 3
      %s32 = scalar_select %p31, 0, %s30
      %s34 = sadd.s32 %s33, 1
      %p37 = scmp.eq.s32.totalorder %s13, 5
      %p38 = scmp.ne.s32.totalorder %s33, %s35
      %p39 = scmp.eq.s32.totalorder %s13, 0
      %p40 = por %p38, %p39
      %p41 = scmp.ne.s32.totalorder %s33, %s35
      %p42 = scmp.eq.s32.totalorder %s18, 5
      %p43 = por %p41, %p42
      %p44 = scmp.ne.s32.totalorder %s35, %s36
      %p45 = scmp.eq.s32.totalorder %s18, 0
      %p46 = por %p44, %p45
      %p47 = scmp.ne.s32.totalorder %s35, %s36
      %p48 = scmp.eq.s32.totalorder %s19, 5
      %p49 = por %p47, %p48
      %p51 = scmp.ne.s32.totalorder %s36, %s50
      %p52 = scmp.eq.s32.totalorder %s19, 0
      %p53 = por %p51, %p52
      %s55 = sadd.s32 %s54, 1
      %p58 = scmp.eq.s32.totalorder %s13, 5
      %p59 = scmp.ne.s32.totalorder %s54, %s56
      %p60 = scmp.eq.s32.totalorder %s13, 0
      %p61 = por %p59, %p60
      %p62 = scmp.ne.s32.totalorder %s54, %s56
      %p63 = scmp.eq.s32.totalorder %s18, 5
      %p64 = por %p62, %p63
      %p65 = scmp.ne.s32.totalorder %s56, %s57
      %p66 = scmp.eq.s32.totalorder %s18, 0
      %p67 = por %p65, %p66
      %p68 = scmp.ne.s32.totalorder %s56, %s57
      %p69 = scmp.eq.s32.totalorder %s19, 5
      %p70 = por %p68, %p69
      %p72 = scmp.ne.s32.totalorder %s57, %s71
      %p73 = scmp.eq.s32.totalorder %s19, 0
      %p74 = por %p72, %p73
      %s75 = ssub.s32 %s21, %s28
      %s76 = ssub.s32 %s20, %s32
      %s77 = sor.u32 %s75, %s76
      %p78 = scmp.eq.s32.totalorder %s77, 0
      %s80 = sadd.s32 %s79, 1
      %s81 = scalar_select %p78, %s79, %s80
      %p84 = pneg %p78
      %p85 = scmp.eq.s32.totalorder %s13, 5
      %p86 = por %p84, %p85
      %p87 = scmp.ne.s32.totalorder %s79, %s82
      %p88 = scmp.eq.s32.totalorder %s13, 0
      %p89 = por %p87, %p88
      %p90 = scmp.ne.s32.totalorder %s79, %s82
      %p91 = scmp.eq.s32.totalorder %s18, 5
      %p92 = por %p90, %p91
      %p93 = scmp.ne.s32.totalorder %s82, %s83
      %p94 = scmp.eq.s32.totalorder %s18, 0
      %p95 = por %p93, %p94
      %p96 = scmp.ne.s32.totalorder %s82, %s83
      %p97 = scmp.eq.s32.totalorder %s19, 5
      %p98 = por %p96, %p97
      %p100 = scmp.ne.s32.totalorder %s83, %s99
      %p101 = scmp.eq.s32.totalorder %s19, 0
      %p102 = por %p100, %p101
      %s103 = ssub.s32 %s20, %s32
      %s104 = ssub.s32 %s21, %s28
      %s105 = sor.u32 %s103, %s104
      %p106 = scmp.eq.s32.totalorder %s105, 0
      %s108 = sadd.s32 %s107, 1
      %s109 = scalar_select %p106, %s107, %s108
      %p112 = pneg %p106
      %p113 = scmp.eq.s32.totalorder %s13, 5
      %p114 = por %p112, %p113
      %p115 = scmp.ne.s32.totalorder %s107, %s110
      %p116 = scmp.eq.s32.totalorder %s13, 0
      %p117 = por %p115, %p116
      %p118 = scmp.ne.s32.totalorder %s107, %s110
      %p119 = scmp.eq.s32.totalorder %s18, 5
      %p120 = por %p118, %p119
      %p121 = scmp.ne.s32.totalorder %s110, %s111
      %p122 = scmp.eq.s32.totalorder %s18, 0
      %p123 = por %p121, %p122
      %p124 = scmp.ne.s32.totalorder %s110, %s111
      %p125 = scmp.eq.s32.totalorder %s19, 5
      %p126 = por %p124, %p125
      %p128 = scmp.ne.s32.totalorder %s111, %s127
      %p129 = scmp.eq.s32.totalorder %s19, 0
      %p130 = por %p128, %p129
      %p131 = scmp.le.s32.totalorder 1, %s13
      %p132 = scmp.lt.s32.totalorder %s13, 7
      %p133 = pnand %p131, %p132
      %p134 = pneg %p133
      // Predicated region
      $region9: #{aug_wrapper_forward.3} parent=5 // pred_check
        _
      $region10: #{aug_wrapper_forward.3} parent=5 // pred_check_branch
        %136 = sbr.rel (%p133) target = $region12
      $region11: #{aug_wrapper_forward.3} parent=5 // pred_region
        %s137 = ssub.s32 %s13, 1
        // Predicated region
        $region13: #{aug_wrapper_forward.3} parent=11 // pred_check
          %p138 = pneg %p46
        $region14: #{aug_wrapper_forward.3} parent=11 // pred_check_branch
          %140 = sbr.rel (%p138) target = $region16
        $region15: #{aug_wrapper_forward.3} parent=11 // pred_region
          _
        $region16: #{aug_wrapper_forward.3} parent=11 // pred_fallthru
          _
        // Predicated region
        $region17: #{aug_wrapper_forward.3} parent=11 // pred_check
          %p141 = pneg %p67
        $region18: #{aug_wrapper_forward.3} parent=11 // pred_check_branch
          %143 = sbr.rel (%p141) target = $region20
        $region19: #{aug_wrapper_forward.3} parent=11 // pred_region
          %s145 = ssub.s32 256, 256
          %146 = vsyncadd [#allocation3], %s145
          %s147 = sshll.u32 [#allocation2], 4
          %s148 = int_to_ptr.vmem [resolvable:$true] %s147
          %153 = dma.hbm_to_vmem [thread:$0]  %s1, 256, %s148, [#allocation3], 128, 128, 8
        $region20: #{aug_wrapper_forward.3} parent=11 // pred_fallthru
          _
      $region12: #{aug_wrapper_forward.3} parent=5 // pred_fallthru
        _
      %p154 = scmp.lt.s32.totalorder %s13, 6
      // Predicated region
      $region21: #{aug_wrapper_forward.3} parent=5 // pred_check
        %p155 = pneg %p154
      $region22: #{aug_wrapper_forward.3} parent=5 // pred_check_branch
        %157 = sbr.rel (%p155) target = $region24
      $region23: #{aug_wrapper_forward.3} parent=5 // pred_region
        // Predicated region
        $region25: #{aug_wrapper_forward.3} parent=23 // pred_check
          %p158 = pneg %p89
        $region26: #{aug_wrapper_forward.3} parent=23 // pred_check_branch
          %160 = sbr.rel (%p158) target = $region28
        $region27: #{aug_wrapper_forward.3} parent=23 // pred_region
          %s161 = sand.u32 %s79, 1
          %s162 = scalar_lea.sflag [#allocation5], %s161
          %s163 = sand.u32 %s79, 1
          %s164 = smul.addr %s163, 16
          %s165 = scalar_lea.vmem [#allocation4], %s164
          %s167 = ssub.s32 256, 256
          %168 = vsyncadd %s162, %s167
          %s169 = smul.addr %s20, 2
          %s170 = smul.addr %s21, 6
          %s171 = sadd.s32 %s169, %s170
          %s172 = smul.addr %s171, 128
          %s173 = scalar_lea.hbm %s2, %s172
          %s174 = sshll.u32 %s165, 4
          %s175 = int_to_ptr.vmem [resolvable:$true] %s174
          %180 = dma.hbm_to_vmem [thread:$0]  %s173, 256, %s175, %s162, 128, 128, 8
        $region28: #{aug_wrapper_forward.3} parent=23 // pred_fallthru
          _
      $region24: #{aug_wrapper_forward.3} parent=5 // pred_fallthru
        _
      %p181 = scmp.le.s32.totalorder 1, %s13
      %p182 = scmp.lt.s32.totalorder %s13, 7
      %p183 = pnand %p181, %p182
      %p184 = pneg %p183
      // Predicated region
      $region29: #{aug_wrapper_forward.3} parent=5 // pred_check
        _
      $region30: #{aug_wrapper_forward.3} parent=5 // pred_check_branch
        %186 = sbr.rel (%p183) target = $region32
      $region31: #{aug_wrapper_forward.3} parent=5 // pred_region
        %s187 = ssub.s32 %s13, 1
        // Predicated region
        $region33: #{aug_wrapper_forward.3} parent=31 // pred_check
          %p188 = pneg %p67
        $region34: #{aug_wrapper_forward.3} parent=31 // pred_check_branch
          %190 = sbr.rel (%p188) target = $region36
        $region35: #{aug_wrapper_forward.3} parent=31 // pred_region
          %191 = dma.done [#allocation3], 256
        $region36: #{aug_wrapper_forward.3} parent=31 // pred_fallthru
          _
        %s192 = sand.u32 %s82, 1
        %s193 = scalar_lea.sflag [#allocation5], %s192
        %s194 = sand.u32 %s82, 1
        %s195 = smul.addr %s194, 16
        %s196 = scalar_lea.vmem [#allocation4], %s195
        // Predicated region
        $region37: #{aug_wrapper_forward.3} parent=31 // pred_check
          %p197 = pneg %p95
        $region38: #{aug_wrapper_forward.3} parent=31 // pred_check_branch
          %199 = sbr.rel (%p197) target = $region40
        $region39: #{aug_wrapper_forward.3} parent=31 // pred_region
          %200 = dma.done %s193, 256
        $region40: #{aug_wrapper_forward.3} parent=31 // pred_fallthru
          _
        %p201 = pneg %p46
        %p202 = pneg %p43
        %p203 = pneg %p67
        %p204 = pneg %p64
        %s205 = sand.u32 %s82, 1
        %s206 = scalar_lea.sflag [#allocation5], %s205
        %s207 = sand.u32 %s82, 1
        %s208 = smul.addr %s207, 16
        %s209 = scalar_lea.vmem [#allocation4], %s208
        %p210 = pneg %p95
        %p211 = pneg %p92
        %p212 = pneg %p123
        %p213 = pneg %p120
        %p214 = scmp.lt.s32.totalorder %s22, 2
        %s215 = scalar_select %p214, %s22, 2
        %p216 = scmp.lt.s32.totalorder %s23, 1
        %s217 = scalar_select %p216, %s23, 1
        %s218 = smul.addr %s217, 2
        %s219 = smul.addr %s215, 4
        %s220 = sadd.s32 %s218, %s219
        %s221 = smul.addr %s220, 8
        %s222 = scalar_lea.vmem %s3, %s221
        %p223 = scmp.lt.s32.totalorder %s22, 2
        %s224 = scalar_select %p223, %s22, 2
        %p225 = scmp.lt.s32.totalorder %s23, 1
        %s226 = scalar_select %p225, %s23, 1
        %s227 = smul.addr %s226, 2
        %s228 = smul.addr %s224, 4
        %s229 = sadd.s32 %s227, %s228
        %s230 = smul.addr %s229, 8
        %s231 = scalar_lea.vmem %s3, %s230
        %v232 = vld [vmem:[%s0] sm:$0xff]
        %v233 = vld [vmem:[%s0 + $0x8] sm:$0xff]
        %v234 = vld [vmem:[%s196] sm:$0xff]
        %v235 = vld [vmem:[%s196 + $0x8] sm:$0xff]
        %vm236 = vcmask 130048
        %v238 = vsel %vm236, %v232, 0
        %v241 = vsel %vm236, %v233, 0
        %243 = vmatprep.subr.mxu0 0.0
        %244 = vmatpush1.msra.mxu0 %v234
        %245 = vmatprep.subr.mxu0 0.0
        %246 = vmatpush1.msra.mxu0 %v235
        %247 = vmatprep.subr.mxu0 0.0
        %248 = vmatpush1.msra.mxu0 0.0
        %249 = vmatprep.subr.mxu0 0.0
        %250 = vmatpush1.msra.mxu0 0.0
        %251 = vmatprep.subr.mxu0 0.0
        %252 = vmatpush1.msra.mxu0 0.0
        %253 = vmatprep.subr.mxu0 0.0
        %254 = vmatpush1.msra.mxu0 0.0
        %255 = vmatprep.subr.mxu0 0.0
        %256 = vmatpush1.msra.mxu0 0.0
        %257 = vmatprep.subr.mxu0 0.0
        %258 = vmatpush1.msra.mxu0 0.0
        %259 = vmatprep.subr.mxu0 0.0
        %260 = vmatpush1.msra.mxu0 0.0
        %261 = vmatprep.subr.mxu0 0.0
        %262 = vmatpush1.msra.mxu0 0.0
        %263 = vmatprep.subr.mxu0 0.0
        %264 = vmatpush1.msra.mxu0 0.0
        %265 = vmatprep.subr.mxu0 0.0
        %266 = vmatpush1.msra.mxu0 0.0
        %267 = vmatprep.subr.mxu0 0.0
        %268 = vmatpush1.msra.mxu0 0.0
        %269 = vmatprep.subr.mxu0 0.0
        %270 = vmatpush1.msra.mxu0 0.0
        %271 = vmatprep.subr.mxu0 0.0
        %272 = vmatpush1.msra.mxu0 0.0
        %273 = vmatprep.subr.mxu0 0.0
        %274 = vmatpush1.msra.mxu0 0.0
        %275 = vmatprep.subr.mxu0 0.0
        %276 = vmatpush1.msra.mxu0 0.0
        %277 = vmatprep.subr.mxu0 0.0
        %278 = vmatpush1.msra.mxu0 0.0
        %279 = vmatprep.subr.mxu0 0.0
        %280 = vmatpush1.msra.mxu0 0.0
        %281 = vmatprep.subr.mxu0 0.0
        %282 = vmatpush1.msra.mxu0 0.0
        %283 = vmatprep.subr.mxu0 0.0
        %284 = vmatpush1.msra.mxu0 0.0
        %285 = vmatprep.subr.mxu0 0.0
        %286 = vmatpush1.msra.mxu0 0.0
        %287 = vmatprep.subr.mxu0 0.0
        %288 = vmatpush1.msra.mxu0 0.0
        %289 = vmatprep.subr.mxu0 0.0
        %290 = vmatpush1.msra.mxu0 0.0
        %291 = vmatprep.subr.mxu0 0.0
        %292 = vmatpush1.msra.mxu0 0.0
        %293 = vmatprep.subr.mxu0 0.0
        %294 = vmatpush1.msra.mxu0 0.0
        %295 = vmatprep.subr.mxu0 0.0
        %296 = vmatpush1.msra.mxu0 0.0
        %297 = vmatprep.subr.mxu0 0.0
        %298 = vmatpush1.msra.mxu0 0.0
        %299 = vmatprep.subr.mxu0 0.0
        %300 = vmatpush1.msra.mxu0 0.0
        %301 = vmatprep.subr.mxu0 0.0
        %302 = vmatpush1.msra.mxu0 0.0
        %303 = vmatprep.subr.mxu0 0.0
        %304 = vmatpush1.msra.mxu0 0.0
        %305 = vmatprep.subr.mxu0 0.0
        %306 = vmatpush1.msra.mxu0 0.0
        %307 = vmatprep.mubr.f32.mxu0 0.0
        %308 = vmatmul.mubr.f32.gmra.mrb[0].mxu0 %v238
        %v309 = vpop.f32.mrb[0].mxu0
        %v310 = vadd.f32 0.0, %v309
        %v311 = vpop.f32.mrb[0].mxu0
        %312 = vmatprep.mubr.f32.mxu0 0.0
        %313 = vmatmul.mubr.f32.gmra.mrb[0].mxu0 %v241
        %v314 = vpop.f32.mrb[0].mxu0
        %v315 = vadd.f32 0.0, %v314
        %v316 = vpop.f32.mrb[0].mxu0
        %317 = vdwg.mxu0
        %v318 = vld [vmem:[#allocation2] sm:$0xff]
        %v319 = vld [vmem:[#allocation2 + $0x8] sm:$0xff]
        %v321 = vsel %vm236, %v310, 0
        %v324 = vsel %vm236, %v315, 0
        %326 = vmatprep.subr.mxu0 0.0
        %327 = vmatpush1.msra.mxu0 %v318
        %328 = vmatprep.subr.mxu0 0.0
        %329 = vmatpush1.msra.mxu0 %v319
        %330 = vmatprep.subr.mxu0 0.0
        %331 = vmatpush1.msra.mxu0 0.0
        %332 = vmatprep.subr.mxu0 0.0
        %333 = vmatpush1.msra.mxu0 0.0
        %334 = vmatprep.subr.mxu0 0.0
        %335 = vmatpush1.msra.mxu0 0.0
        %336 = vmatprep.subr.mxu0 0.0
        %337 = vmatpush1.msra.mxu0 0.0
        %338 = vmatprep.subr.mxu0 0.0
        %339 = vmatpush1.msra.mxu0 0.0
        %340 = vmatprep.subr.mxu0 0.0
        %341 = vmatpush1.msra.mxu0 0.0
        %342 = vmatprep.subr.mxu0 0.0
        %343 = vmatpush1.msra.mxu0 0.0
        %344 = vmatprep.subr.mxu0 0.0
        %345 = vmatpush1.msra.mxu0 0.0
        %346 = vmatprep.subr.mxu0 0.0
        %347 = vmatpush1.msra.mxu0 0.0
        %348 = vmatprep.subr.mxu0 0.0
        %349 = vmatpush1.msra.mxu0 0.0
        %350 = vmatprep.subr.mxu0 0.0
        %351 = vmatpush1.msra.mxu0 0.0
        %352 = vmatprep.subr.mxu0 0.0
        %353 = vmatpush1.msra.mxu0 0.0
        %354 = vmatprep.subr.mxu0 0.0
        %355 = vmatpush1.msra.mxu0 0.0
        %356 = vmatprep.subr.mxu0 0.0
        %357 = vmatpush1.msra.mxu0 0.0
        %358 = vmatprep.subr.mxu0 0.0
        %359 = vmatpush1.msra.mxu0 0.0
        %360 = vmatprep.subr.mxu0 0.0
        %361 = vmatpush1.msra.mxu0 0.0
        %362 = vmatprep.subr.mxu0 0.0
        %363 = vmatpush1.msra.mxu0 0.0
        %364 = vmatprep.subr.mxu0 0.0
        %365 = vmatpush1.msra.mxu0 0.0
        %366 = vmatprep.subr.mxu0 0.0
        %367 = vmatpush1.msra.mxu0 0.0
        %368 = vmatprep.subr.mxu0 0.0
        %369 = vmatpush1.msra.mxu0 0.0
        %370 = vmatprep.subr.mxu0 0.0
        %371 = vmatpush1.msra.mxu0 0.0
        %372 = vmatprep.subr.mxu0 0.0
        %373 = vmatpush1.msra.mxu0 0.0
        %374 = vmatprep.subr.mxu0 0.0
        %375 = vmatpush1.msra.mxu0 0.0
        %376 = vmatprep.subr.mxu0 0.0
        %377 = vmatpush1.msra.mxu0 0.0
        %378 = vmatprep.subr.mxu0 0.0
        %379 = vmatpush1.msra.mxu0 0.0
        %380 = vmatprep.subr.mxu0 0.0
        %381 = vmatpush1.msra.mxu0 0.0
        %382 = vmatprep.subr.mxu0 0.0
        %383 = vmatpush1.msra.mxu0 0.0
        %384 = vmatprep.subr.mxu0 0.0
        %385 = vmatpush1.msra.mxu0 0.0
        %386 = vmatprep.subr.mxu0 0.0
        %387 = vmatpush1.msra.mxu0 0.0
        %388 = vmatprep.subr.mxu0 0.0
        %389 = vmatpush1.msra.mxu0 0.0
        %390 = vmatprep.mubr.f32.mxu0 0.0
        %391 = vmatmul.mubr.f32.gmra.mrb[0].mxu0 %v321
        %v392 = vpop.f32.mrb[0].mxu0
        %v393 = vadd.f32 0.0, %v392
        %v394 = vpop.f32.mrb[0].mxu0
        %395 = vmatprep.mubr.f32.mxu0 0.0
        %396 = vmatmul.mubr.f32.gmra.mrb[0].mxu0 %v324
        %v397 = vpop.f32.mrb[0].mxu0
        %v398 = vadd.f32 0.0, %v397
        %v399 = vpop.f32.mrb[0].mxu0
        %400 = vdwg.mxu0
        %401 = vst.msk [vmem:[%s231] sm:$0xff] %vm236, %v393
        %402 = vst.msk [vmem:[%s231 + $0x8] sm:$0xff] %vm236, %v398
        %p403 = scmp.lt.s32.totalorder %s22, 2
        %s404 = scalar_select %p403, %s22, 2
        %p405 = scmp.lt.s32.totalorder %s23, 1
        %s406 = scalar_select %p405, %s23, 1
        %s407 = smul.addr %s406, 2
        %s408 = smul.addr %s404, 4
        %s409 = sadd.s32 %s407, %s408
        %s410 = smul.addr %s409, 8
        %s411 = scalar_lea.vmem %s3, %s410
        // Predicated region
        $region41: #{aug_wrapper_forward.3} parent=31 // pred_check
          %p412 = pneg %p120
        $region42: #{aug_wrapper_forward.3} parent=31 // pred_check_branch
          %414 = sbr.rel (%p412) target = $region44
        $region43: #{aug_wrapper_forward.3} parent=31 // pred_region
          _
        $region44: #{aug_wrapper_forward.3} parent=31 // pred_fallthru
          _
      $region32: #{aug_wrapper_forward.3} parent=5 // pred_fallthru
        _
      %p415 = scmp.le.s32.totalorder 2, %s13
      // Predicated region
      $region45: #{aug_wrapper_forward.3} parent=5 // pred_check
        %p416 = pneg %p415
      $region46: #{aug_wrapper_forward.3} parent=5 // pred_check_branch
        %418 = sbr.rel (%p416) target = $region48
      $region47: #{aug_wrapper_forward.3} parent=5 // pred_region
        %s419 = ssub.s32 %s13, 2
        // Predicated region
        $region49: #{aug_wrapper_forward.3} parent=47 // pred_check
          %p420 = pneg %p126
        $region50: #{aug_wrapper_forward.3} parent=47 // pred_check_branch
          %422 = sbr.rel (%p420) target = $region52
        $region51: #{aug_wrapper_forward.3} parent=47 // pred_region
          %p423 = scmp.lt.s32.totalorder %s24, 2
          %s424 = scalar_select %p423, %s24, 2
          %p425 = scmp.lt.s32.totalorder %s25, 1
          %s426 = scalar_select %p425, %s25, 1
          %s427 = smul.addr %s426, 2
          %s428 = smul.addr %s424, 4
          %s429 = sadd.s32 %s427, %s428
          %s430 = smul.addr %s429, 8
          %s431 = scalar_lea.vmem %s3, %s430
        $region52: #{aug_wrapper_forward.3} parent=47 // pred_fallthru
          _
      $region48: #{aug_wrapper_forward.3} parent=5 // pred_fallthru
        _
    $region6: #{aug_wrapper_forward.3} parent=1 // loop_footer
      %s17 = sadd.s32 1, %s13
    $region7: #{aug_wrapper_forward.3} parent=1 // loop_footer_branch
      %12 = sbr.rel target = $region3
    $region8: #{aug_wrapper_forward.3} parent=1 // loop_exit
      _
    %432 = vsyncpa [#allocation3], 1
    %s433 = scalar_lea.sflag [#allocation3], 1
    %434 = vsyncpa %s433, 1
    %435 = vsyncpa [#allocation5], 1
    %s436 = scalar_lea.sflag [#allocation5], 1
    %437 = vsyncpa %s436, 1

// kernel: aug_wrapper_forward.4
$region0: #{aug_wrapper_forward.4}
  #allocation0 [shape = 'u32[]', space=smem, size = 0x4, offset = 0x4, fixed_abs, tag = 'smem constant byte address 0x4 - core index']
  #allocation1 [shape = 'u32[144,128]{1,0:T(1,128)}', space=vmem, size = 0x12000, scoped, tag = 'internal scratch']
  #allocation2 [shape = 'f32[16,128]{1,0:T(8,128)}', space=vmem, size = 0x2000, scoped, tag = 'scratch operand']
  %s0 = inlined_call_operand.vmem [shape: bf16[16,48], index: 0, kind: input, shape index: {}]
  %s1 = inlined_call_operand.vmem [shape: bf16[48,128], index: 1, kind: input, shape index: {}]
  %s2 = inlined_call_operand.vmem [shape: f32[16,1], index: 2, kind: input, shape index: {}]
  %s3 = inlined_call_operand.vmem [shape: f32[16,128], index: 3, kind: output, shape index: {}]
  %s4 = sld [smem:[#allocation0]]
  $region30: #{aug_wrapper_forward.4} parent=0
    _
  %s6 = ssub.s32 1, %s4
  %s7 = scalar_select 0, %s6, %s4
  // Predicated region
  $region2: #{aug_wrapper_forward.4} parent=0 // pred_check
    _
  $region3: #{aug_wrapper_forward.4} parent=0 // pred_check_branch
    %9 = sbr.rel (0) target = $region5
  $region4: #{aug_wrapper_forward.4} parent=0 // pred_region
    _
  $region5: #{aug_wrapper_forward.4} parent=0 // pred_fallthru
    _
  // Predicated region
  $region6: #{aug_wrapper_forward.4} parent=0 // pred_check
    _
  $region7: #{aug_wrapper_forward.4} parent=0 // pred_check_branch
    %11 = sbr.rel (0) target = $region9
  $region8: #{aug_wrapper_forward.4} parent=0 // pred_region
    _
  $region9: #{aug_wrapper_forward.4} parent=0 // pred_fallthru
    _
  // Predicated region
  $region10: #{aug_wrapper_forward.4} parent=0 // pred_check
    _
  $region11: #{aug_wrapper_forward.4} parent=0 // pred_check_branch
    %13 = sbr.rel (0) target = $region13
  $region12: #{aug_wrapper_forward.4} parent=0 // pred_region
    _
  $region13: #{aug_wrapper_forward.4} parent=0 // pred_fallthru
    _
  %p15 = scmp.eq.s32.totalorder 0, 0
  // Predicated region
  $region14: #{aug_wrapper_forward.4} parent=0 // pred_check
    %p16 = pneg %p15
  $region15: #{aug_wrapper_forward.4} parent=0 // pred_check_branch
    %18 = sbr.rel (%p16) target = $region17
  $region16: #{aug_wrapper_forward.4} parent=0 // pred_region
    %19 = vst [vmem:[#allocation2] sm:$0xff] 0.0
    %20 = vst [vmem:[#allocation2 + $0x8] sm:$0xff] 0.0
  $region17: #{aug_wrapper_forward.4} parent=0 // pred_fallthru
    _
  %v21 = vld [vmem:[#allocation2] sm:$0xff]
  %v22 = vld [vmem:[#allocation2 + $0x8] sm:$0xff]
  %v23 = vld [vmem:[%s0] sm:$0xf]
  %v24 = vld [vmem:[%s0 + $0x4] sm:$0xf]
  %v25 = vld [vmem:[%s1] sm:$0xf]
  %v26 = vld [vmem:[%s1 + $0x4] sm:$0xf]
  %v27 = vld [vmem:[%s1 + $0x8] sm:$0xf]
  %v28 = vld [vmem:[%s1 + $0xc] sm:$0xf]
  %v29 = vld [vmem:[%s1 + $0x10] sm:$0xf]
  %v30 = vld [vmem:[%s1 + $0x14] sm:$0xf]
  %v33 = vunpack.c.l.b16 %v23
  %v34 = vunpack.c.l.b16 %v24
  %v35 = vpack.c.b16 %v34, %v33
  %v42 = vunpack.c.l.b16 %v25
  %v43 = vunpack.c.l.b16 %v26
  %v44 = vunpack.c.l.b16 %v27
  %v45 = vunpack.c.l.b16 %v28
  %v46 = vunpack.c.l.b16 %v29
  %v47 = vunpack.c.l.b16 %v30
  %v48 = vpack.c.b16 %v43, %v42
  %v49 = vpack.c.b16 %v45, %v44
  %v50 = vpack.c.b16 %v47, %v46
  %vm54 = vcmask 392192
  %v56 = vsel %vm54, %v35, 0
  %58 = vmatprep.subr.bf16.mxu0 0
  %59 = vmatpush1.bf16.msra.mxu0 %v48
  %60 = vmatprep.subr.bf16.mxu0 0
  %61 = vmatpush1.bf16.msra.mxu0 %v49
  %62 = vmatprep.subr.bf16.mxu0 0
  %63 = vmatpush1.bf16.msra.mxu0 %v50
  %64 = vmatprep.subr.bf16.mxu0 0
  %65 = vmatpush1.bf16.msra.mxu0 0
  %66 = vmatprep.subr.bf16.mxu0 0
  %67 = vmatpush1.bf16.msra.mxu0 0
  %68 = vmatprep.subr.bf16.mxu0 0
  %69 = vmatpush1.bf16.msra.mxu0 0
  %70 = vmatprep.subr.bf16.mxu0 0
  %71 = vmatpush1.bf16.msra.mxu0 0
  %72 = vmatprep.subr.bf16.mxu0 0
  %73 = vmatpush1.bf16.msra.mxu0 0
  %74 = vmatprep.subr.bf16.mxu0 0
  %75 = vmatpush1.bf16.msra.mxu0 0
  %76 = vmatprep.subr.bf16.mxu0 0
  %77 = vmatpush1.bf16.msra.mxu0 0
  %78 = vmatprep.subr.bf16.mxu0 0
  %79 = vmatpush1.bf16.msra.mxu0 0
  %80 = vmatprep.subr.bf16.mxu0 0
  %81 = vmatpush1.bf16.msra.mxu0 0
  %82 = vmatprep.subr.bf16.mxu0 0
  %83 = vmatpush1.bf16.msra.mxu0 0
  %84 = vmatprep.subr.bf16.mxu0 0
  %85 = vmatpush1.bf16.msra.mxu0 0
  %86 = vmatprep.subr.bf16.mxu0 0
  %87 = vmatpush1.bf16.msra.mxu0 0
  %88 = vmatprep.subr.bf16.mxu0 0
  %89 = vmatpush1.bf16.msra.mxu0 0
  %90 = vmatprep.mubr.bf16.mxu0 0
  %91 = vmatmul.mubr.bf16.gmra.mrb[0].mxu0 %v56
  %v92 = vpop.f32.mrb[0].mxu0
  %v93 = vadd.f32 0.0, %v92
  %v94 = vpop.f32.mrb[0].mxu0
  %v95 = vpop.f32.mrb[0].mxu0
  %v96 = vadd.f32 0.0, %v95
  %v97 = vpop.f32.mrb[0].mxu0
  %98 = vdwg.mxu0
  %v99 = vadd.f32 %v21, %v93
  %v100 = vadd.f32 %v22, %v96
  %101 = vst [vmem:[#allocation2] sm:$0xff] %v99
  %102 = vst [vmem:[#allocation2 + $0x8] sm:$0xff] %v100
  // Predicated region
  $region18: #{aug_wrapper_forward.4} parent=0 // pred_check
    %p103 = pneg %p15
  $region19: #{aug_wrapper_forward.4} parent=0 // pred_check_branch
    %105 = sbr.rel (%p103) target = $region21
  $region20: #{aug_wrapper_forward.4} parent=0 // pred_region
    %v106 = vld [vmem:[#allocation2] sm:$0xff]
    %v107 = vld [vmem:[#allocation2 + $0x8] sm:$0xff]
    %v108 = vld [vmem:[%s2] sm:$0xff]
    %v109 = vld [vmem:[%s2 + $0x8] sm:$0xff]
    %111 = vset.pattern.permute.xlu0 0
    %112 = vperm.xlu0 %111, %v108
    %v113 = vpop.permute.xlu0 %112
    %116 = vset.pattern.permute.xlu0 0
    %117 = vperm.xlu0 %116, %v109
    %v118 = vpop.permute.xlu0 %117
    %v120 = vadd.f32 %v106, %v113
    %v121 = vadd.f32 %v107, %v118
    %vm122 = vcmp.ge.f32.partialorder %v120, 0.0
    %vm123 = vcmp.ge.f32.partialorder %v121, 0.0
    %v124 = vmul.f32 %v120, 0.2
    %v125 = vmul.f32 %v121, 0.2
    %v126 = vsel %vm122, %v120, %v124
    %v127 = vsel %vm123, %v121, %v125
    %128 = vst [vmem:[%s3] sm:$0xff] %v126
    %129 = vst [vmem:[%s3 + $0x8] sm:$0xff] %v127
  $region21: #{aug_wrapper_forward.4} parent=0 // pred_fallthru
    _
  // Predicated region
  $region22: #{aug_wrapper_forward.4} parent=0 // pred_check
    _
  $region23: #{aug_wrapper_forward.4} parent=0 // pred_check_branch
    %131 = sbr.rel (0) target = $region25
  $region24: #{aug_wrapper_forward.4} parent=0 // pred_region
    _
  $region25: #{aug_wrapper_forward.4} parent=0 // pred_fallthru
    _
  // Predicated region
  $region26: #{aug_wrapper_forward.4} parent=0 // pred_check
    _
  $region27: #{aug_wrapper_forward.4} parent=0 // pred_check_branch
    %133 = sbr.rel (0) target = $region29
  $region28: #{aug_wrapper_forward.4} parent=0 // pred_region
    _
  $region29: #{aug_wrapper_forward.4} parent=0 // pred_fallthru
    _

// kernel: aug_wrapper_forward.5
$region0: #{aug_wrapper_forward.5}
  #allocation0 [shape = 'u32[]', space=smem, size = 0x4, offset = 0x4, fixed_abs, tag = 'smem constant byte address 0x4 - core index']
  #allocation1 [shape = 'u32[144,128]{1,0:T(1,128)}', space=vmem, size = 0x12000, scoped, tag = 'internal scratch']
  #allocation2 [shape = 'f32[32,128]{1,0:T(8,128)}', space=vmem, size = 0x4000, scoped, tag = 'scratch operand']
  %s0 = inlined_call_operand.vmem [shape: bf16[32,256], index: 0, kind: input, shape index: {}]
  %s1 = inlined_call_operand.vmem [shape: bf16[256,128], index: 1, kind: input, shape index: {}]
  %s2 = inlined_call_operand.vmem [shape: f32[32,1], index: 2, kind: input, shape index: {}]
  %s3 = inlined_call_operand.vmem [shape: f32[32,128], index: 3, kind: output, shape index: {}]
  %s4 = sld [smem:[#allocation0]]
  $region30: #{aug_wrapper_forward.5} parent=0
    _
  %s6 = ssub.s32 1, %s4
  %s7 = scalar_select 0, %s6, %s4
  // Predicated region
  $region2: #{aug_wrapper_forward.5} parent=0 // pred_check
    _
  $region3: #{aug_wrapper_forward.5} parent=0 // pred_check_branch
    %9 = sbr.rel (0) target = $region5
  $region4: #{aug_wrapper_forward.5} parent=0 // pred_region
    _
  $region5: #{aug_wrapper_forward.5} parent=0 // pred_fallthru
    _
  // Predicated region
  $region6: #{aug_wrapper_forward.5} parent=0 // pred_check
    _
  $region7: #{aug_wrapper_forward.5} parent=0 // pred_check_branch
    %11 = sbr.rel (0) target = $region9
  $region8: #{aug_wrapper_forward.5} parent=0 // pred_region
    _
  $region9: #{aug_wrapper_forward.5} parent=0 // pred_fallthru
    _
  // Predicated region
  $region10: #{aug_wrapper_forward.5} parent=0 // pred_check
    _
  $region11: #{aug_wrapper_forward.5} parent=0 // pred_check_branch
    %13 = sbr.rel (0) target = $region13
  $region12: #{aug_wrapper_forward.5} parent=0 // pred_region
    _
  $region13: #{aug_wrapper_forward.5} parent=0 // pred_fallthru
    _
  %p15 = scmp.eq.s32.totalorder 0, 0
  // Predicated region
  $region14: #{aug_wrapper_forward.5} parent=0 // pred_check
    %p16 = pneg %p15
  $region15: #{aug_wrapper_forward.5} parent=0 // pred_check_branch
    %18 = sbr.rel (%p16) target = $region17
  $region16: #{aug_wrapper_forward.5} parent=0 // pred_region
    %19 = vst [vmem:[#allocation2] sm:$0xff] 0.0
    %20 = vst [vmem:[#allocation2 + $0x8] sm:$0xff] 0.0
    %21 = vst [vmem:[#allocation2 + $0x10] sm:$0xff] 0.0
    %22 = vst [vmem:[#allocation2 + $0x18] sm:$0xff] 0.0
  $region17: #{aug_wrapper_forward.5} parent=0 // pred_fallthru
    _
  %v23 = vld [vmem:[#allocation2] sm:$0xff]
  %v24 = vld [vmem:[#allocation2 + $0x8] sm:$0xff]
  %v25 = vld [vmem:[#allocation2 + $0x10] sm:$0xff]
  %v26 = vld [vmem:[#allocation2 + $0x18] sm:$0xff]
  %v27 = vld [vmem:[%s0] sm:$0xff]
  %v28 = vld [vmem:[%s0 + $0x8] sm:$0xff]
  %v29 = vld [vmem:[%s0 + $0x10] sm:$0xff]
  %v30 = vld [vmem:[%s0 + $0x18] sm:$0xff]
  %v31 = vld [vmem:[%s1] sm:$0xf]
  %v32 = vld [vmem:[%s1 + $0x4] sm:$0xf]
  %v33 = vld [vmem:[%s1 + $0x8] sm:$0xf]
  %v34 = vld [vmem:[%s1 + $0xc] sm:$0xf]
  %v35 = vld [vmem:[%s1 + $0x10] sm:$0xf]
  %v36 = vld [vmem:[%s1 + $0x14] sm:$0xf]
  %v37 = vld [vmem:[%s1 + $0x18] sm:$0xf]
  %v38 = vld [vmem:[%s1 + $0x1c] sm:$0xf]
  %v39 = vld [vmem:[%s1 + $0x20] sm:$0xf]
  %v40 = vld [vmem:[%s1 + $0x24] sm:$0xf]
  %v41 = vld [vmem:[%s1 + $0x28] sm:$0xf]
  %v42 = vld [vmem:[%s1 + $0x2c] sm:$0xf]
  %v43 = vld [vmem:[%s1 + $0x30] sm:$0xf]
  %v44 = vld [vmem:[%s1 + $0x34] sm:$0xf]
  %v45 = vld [vmem:[%s1 + $0x38] sm:$0xf]
  %v46 = vld [vmem:[%s1 + $0x3c] sm:$0xf]
  %v47 = vld [vmem:[%s1 + $0x40] sm:$0xf]
  %v48 = vld [vmem:[%s1 + $0x44] sm:$0xf]
  %v49 = vld [vmem:[%s1 + $0x48] sm:$0xf]
  %v50 = vld [vmem:[%s1 + $0x4c] sm:$0xf]
  %v51 = vld [vmem:[%s1 + $0x50] sm:$0xf]
  %v52 = vld [vmem:[%s1 + $0x54] sm:$0xf]
  %v53 = vld [vmem:[%s1 + $0x58] sm:$0xf]
  %v54 = vld [vmem:[%s1 + $0x5c] sm:$0xf]
  %v55 = vld [vmem:[%s1 + $0x60] sm:$0xf]
  %v56 = vld [vmem:[%s1 + $0x64] sm:$0xf]
  %v57 = vld [vmem:[%s1 + $0x68] sm:$0xf]
  %v58 = vld [vmem:[%s1 + $0x6c] sm:$0xf]
  %v59 = vld [vmem:[%s1 + $0x70] sm:$0xf]
  %v60 = vld [vmem:[%s1 + $0x74] sm:$0xf]
  %v61 = vld [vmem:[%s1 + $0x78] sm:$0xf]
  %v62 = vld [vmem:[%s1 + $0x7c] sm:$0xf]
  %v67 = vunpack.c.l.b16 %v27
  %v68 = vunpack.c.h.b16 %v27
  %v69 = vunpack.c.l.b16 %v28
  %v70 = vunpack.c.h.b16 %v28
  %v71 = vunpack.c.l.b16 %v29
  %v72 = vunpack.c.h.b16 %v29
  %v73 = vunpack.c.l.b16 %v30
  %v74 = vunpack.c.h.b16 %v30
  %v75 = vpack.c.b16 %v69, %v67
  %v76 = vpack.c.b16 %v70, %v68
  %v77 = vpack.c.b16 %v73, %v71
  %v78 = vpack.c.b16 %v74, %v72
  %v115 = vunpack.c.l.b16 %v31
  %v116 = vunpack.c.l.b16 %v32
  %v117 = vunpack.c.l.b16 %v33
  %v118 = vunpack.c.l.b16 %v34
  %v119 = vunpack.c.l.b16 %v35
  %v120 = vunpack.c.l.b16 %v36
  %v121 = vunpack.c.l.b16 %v37
  %v122 = vunpack.c.l.b16 %v38
  %v123 = vunpack.c.l.b16 %v39
  %v124 = vunpack.c.l.b16 %v40
  %v125 = vunpack.c.l.b16 %v41
  %v126 = vunpack.c.l.b16 %v42
  %v127 = vunpack.c.l.b16 %v43
  %v128 = vunpack.c.l.b16 %v44
  %v129 = vunpack.c.l.b16 %v45
  %v130 = vunpack.c.l.b16 %v46
  %v131 = vunpack.c.l.b16 %v47
  %v132 = vunpack.c.l.b16 %v48
  %v133 = vunpack.c.l.b16 %v49
  %v134 = vunpack.c.l.b16 %v50
  %v135 = vunpack.c.l.b16 %v51
  %v136 = vunpack.c.l.b16 %v52
  %v137 = vunpack.c.l.b16 %v53
  %v138 = vunpack.c.l.b16 %v54
  %v139 = vunpack.c.l.b16 %v55
  %v140 = vunpack.c.l.b16 %v56
  %v141 = vunpack.c.l.b16 %v57
  %v142 = vunpack.c.l.b16 %v58
  %v143 = vunpack.c.l.b16 %v59
  %v144 = vunpack.c.l.b16 %v60
  %v145 = vunpack.c.l.b16 %v61
  %v146 = vunpack.c.l.b16 %v62
  %v147 = vpack.c.b16 %v116, %v115
  %v148 = vpack.c.b16 %v118, %v117
  %v149 = vpack.c.b16 %v120, %v119
  %v150 = vpack.c.b16 %v122, %v121
  %v151 = vpack.c.b16 %v124, %v123
  %v152 = vpack.c.b16 %v126, %v125
  %v153 = vpack.c.b16 %v128, %v127
  %v154 = vpack.c.b16 %v130, %v129
  %v155 = vpack.c.b16 %v132, %v131
  %v156 = vpack.c.b16 %v134, %v133
  %v157 = vpack.c.b16 %v136, %v135
  %v158 = vpack.c.b16 %v138, %v137
  %v159 = vpack.c.b16 %v140, %v139
  %v160 = vpack.c.b16 %v142, %v141
  %v161 = vpack.c.b16 %v144, %v143
  %v162 = vpack.c.b16 %v146, %v145
  %179 = vmatprep.subr.bf16.mxu0 0
  %180 = vmatpush1.bf16.msra.mxu0 %v147
  %181 = vmatprep.subr.bf16.mxu0 0
  %182 = vmatpush1.bf16.msra.mxu0 %v148
  %183 = vmatprep.subr.bf16.mxu0 0
  %184 = vmatpush1.bf16.msra.mxu0 %v149
  %185 = vmatprep.subr.bf16.mxu0 0
  %186 = vmatpush1.bf16.msra.mxu0 %v150
  %187 = vmatprep.subr.bf16.mxu0 0
  %188 = vmatpush1.bf16.msra.mxu0 %v151
  %189 = vmatprep.subr.bf16.mxu0 0
  %190 = vmatpush1.bf16.msra.mxu0 %v152
  %191 = vmatprep.subr.bf16.mxu0 0
  %192 = vmatpush1.bf16.msra.mxu0 %v153
  %193 = vmatprep.subr.bf16.mxu0 0
  %194 = vmatpush1.bf16.msra.mxu0 %v154
  %195 = vmatprep.subr.bf16.mxu0 0
  %196 = vmatpush1.bf16.msra.mxu0 %v155
  %197 = vmatprep.subr.bf16.mxu0 0
  %198 = vmatpush1.bf16.msra.mxu0 %v156
  %199 = vmatprep.subr.bf16.mxu0 0
  %200 = vmatpush1.bf16.msra.mxu0 %v157
  %201 = vmatprep.subr.bf16.mxu0 0
  %202 = vmatpush1.bf16.msra.mxu0 %v158
  %203 = vmatprep.subr.bf16.mxu0 0
  %204 = vmatpush1.bf16.msra.mxu0 %v159
  %205 = vmatprep.subr.bf16.mxu0 0
  %206 = vmatpush1.bf16.msra.mxu0 %v160
  %207 = vmatprep.subr.bf16.mxu0 0
  %208 = vmatpush1.bf16.msra.mxu0 %v161
  %209 = vmatprep.subr.bf16.mxu0 0
  %210 = vmatpush1.bf16.msra.mxu0 %v162
  %211 = vmatprep.mubr.bf16.mxu0 %v76
  %212 = vmatmul.mubr.bf16.gmra.mrb[0].mxu0 %v75
  %v213 = vpop.f32.mrb[0].mxu0
  %v214 = vadd.f32 0.0, %v213
  %v215 = vpop.f32.mrb[0].mxu0
  %v216 = vpop.f32.mrb[0].mxu0
  %v217 = vadd.f32 0.0, %v216
  %v218 = vpop.f32.mrb[0].mxu0
  %219 = vmatprep.mubr.bf16.mxu0 %v78
  %220 = vmatmul.mubr.bf16.gmra.mrb[0].mxu0 %v77
  %v221 = vpop.f32.mrb[0].mxu0
  %v222 = vadd.f32 0.0, %v221
  %v223 = vpop.f32.mrb[0].mxu0
  %v224 = vpop.f32.mrb[0].mxu0
  %v225 = vadd.f32 0.0, %v224
  %v226 = vpop.f32.mrb[0].mxu0
  %227 = vdwg.mxu0
  %v228 = vadd.f32 %v23, %v214
  %v229 = vadd.f32 %v24, %v217
  %v230 = vadd.f32 %v25, %v222
  %v231 = vadd.f32 %v26, %v225
  %232 = vst [vmem:[#allocation2] sm:$0xff] %v228
  %233 = vst [vmem:[#allocation2 + $0x8] sm:$0xff] %v229
  %234 = vst [vmem:[#allocation2 + $0x10] sm:$0xff] %v230
  %235 = vst [vmem:[#allocation2 + $0x18] sm:$0xff] %v231
  // Predicated region
  $region18: #{aug_wrapper_forward.5} parent=0 // pred_check
    %p236 = pneg %p15
  $region19: #{aug_wrapper_forward.5} parent=0 // pred_check_branch
    %238 = sbr.rel (%p236) target = $region21
  $region20: #{aug_wrapper_forward.5} parent=0 // pred_region
    %v239 = vld [vmem:[#allocation2] sm:$0xff]
    %v240 = vld [vmem:[#allocation2 + $0x8] sm:$0xff]
    %v241 = vld [vmem:[#allocation2 + $0x10] sm:$0xff]
    %v242 = vld [vmem:[#allocation2 + $0x18] sm:$0xff]
    %v243 = vld [vmem:[%s2] sm:$0xff]
    %v244 = vld [vmem:[%s2 + $0x8] sm:$0xff]
    %v245 = vld [vmem:[%s2 + $0x10] sm:$0xff]
    %v246 = vld [vmem:[%s2 + $0x18] sm:$0xff]
    %248 = vset.pattern.permute.xlu0 0
    %249 = vperm.xlu0 %248, %v243
    %v250 = vpop.permute.xlu0 %249
    %253 = vset.pattern.permute.xlu0 0
    %254 = vperm.xlu0 %253, %v244
    %v255 = vpop.permute.xlu0 %254
    %258 = vset.pattern.permute.xlu0 0
    %259 = vperm.xlu0 %258, %v245
    %v260 = vpop.permute.xlu0 %259
    %263 = vset.pattern.permute.xlu0 0
    %264 = vperm.xlu0 %263, %v246
    %v265 = vpop.permute.xlu0 %264
    %v267 = vadd.f32 %v239, %v250
    %v268 = vadd.f32 %v240, %v255
    %v269 = vadd.f32 %v241, %v260
    %v270 = vadd.f32 %v242, %v265
    %vm271 = vcmp.ge.f32.partialorder %v267, 0.0
    %vm272 = vcmp.ge.f32.partialorder %v268, 0.0
    %vm273 = vcmp.ge.f32.partialorder %v269, 0.0
    %vm274 = vcmp.ge.f32.partialorder %v270, 0.0
    %v275 = vmul.f32 %v267, 0.2
    %v276 = vmul.f32 %v268, 0.2
    %v277 = vmul.f32 %v269, 0.2
    %v278 = vmul.f32 %v270, 0.2
    %v279 = vsel %vm271, %v267, %v275
    %v280 = vsel %vm272, %v268, %v276
    %v281 = vsel %vm273, %v269, %v277
    %v282 = vsel %vm274, %v270, %v278
    %283 = vst [vmem:[%s3] sm:$0xff] %v279
    %284 = vst [vmem:[%s3 + $0x8] sm:$0xff] %v280
    %285 = vst [vmem:[%s3 + $0x10] sm:$0xff] %v281
    %286 = vst [vmem:[%s3 + $0x18] sm:$0xff] %v282
  $region21: #{aug_wrapper_forward.5} parent=0 // pred_fallthru
    _
  // Predicated region
  $region22: #{aug_wrapper_forward.5} parent=0 // pred_check
    _
  $region23: #{aug_wrapper_forward.5} parent=0 // pred_check_branch
    %288 = sbr.rel (0) target = $region25
  $region24: #{aug_wrapper_forward.5} parent=0 // pred_region
    _
  $region25: #{aug_wrapper_forward.5} parent=0 // pred_fallthru
    _
  // Predicated region
  $region26: #{aug_wrapper_forward.5} parent=0 // pred_check
    _
  $region27: #{aug_wrapper_forward.5} parent=0 // pred_check_branch
    %290 = sbr.rel (0) target = $region29
  $region28: #{aug_wrapper_forward.5} parent=0 // pred_region
    _
  $region29: #{aug_wrapper_forward.5} parent=0 // pred_fallthru
    _

</llo_original>
